<compile_context>
chip_gen: v7x
topology: tpu7x:2x2x1
jax: 0.10.0
libtpu: 0.0.40
codegen_flags: <defaults>
</compile_context>

<pallas_src>
import jax
import jax.numpy as jnp
from jax.experimental import pallas as pl
from jax.experimental.pallas import tpu as pltpu


def _fc_discriminator_kernel(x_ref,
                             w1_ref, g1_ref, be1_ref,
                             w2_ref, g2_ref, be2_ref,
                             w3_ref, b3_ref,
                             out_ref):
    eps = jnp.float32(1e-5)
    neg_slope = jnp.float32(0.2)
    inv_n = jnp.float32(1.0 / x_ref.shape[0])

    x = x_ref[...]                                                       # (N, D) bf16

    # ---- Layer 1: Linear(D, h) [bias folded out] + BN(train) + LeakyReLU ----
    h1 = jnp.dot(x, w1_ref[...], preferred_element_type=jnp.float32)    # (N, h) f32
    mu1 = jnp.sum(h1, axis=0, keepdims=True) * inv_n                    # (1, h)
    var1 = jnp.sum(h1 * h1, axis=0, keepdims=True) * inv_n - mu1 * mu1  # biased var
    scale1 = g1_ref[...] * jax.lax.rsqrt(var1 + eps)                    # (1, h) EUP
    shift1 = be1_ref[...] - mu1 * scale1                                 # (1, h)
    h1 = h1 * scale1 + shift1
    h1 = jnp.where(h1 >= 0.0, h1, neg_slope * h1)

    # ---- Layer 2: Linear(h, h) [bias folded out] + BN(train) + LeakyReLU ----
    h2 = jnp.dot(h1.astype(jnp.bfloat16), w2_ref[...],
                 preferred_element_type=jnp.float32)                     # (N, h) f32
    mu2 = jnp.sum(h2, axis=0, keepdims=True) * inv_n
    var2 = jnp.sum(h2 * h2, axis=0, keepdims=True) * inv_n - mu2 * mu2
    scale2 = g2_ref[...] * jax.lax.rsqrt(var2 + eps)
    shift2 = be2_ref[...] - mu2 * scale2
    h2 = h2 * scale2 + shift2
    h2 = jnp.where(h2 >= 0.0, h2, neg_slope * h2)

    # ---- Layer 3: Linear(h, 1) + Sigmoid as a VPU mul + cross-lane reduce ----
    logits = jnp.sum(h2 * w3_ref[...], axis=1, keepdims=True) + b3_ref[...]  # (N, 1)
    out_ref[...] = jax.nn.sigmoid(logits).astype(out_ref.dtype)


def fc_discriminator(x, params):
    """x: (N, D) float32 (already flattened); returns (N, 1) float32 in [0, 1]."""
    N = x.shape[0]
    args = (x.astype(jnp.bfloat16),
            params["w1"], params["g1"], params["be1"],
            params["w2"], params["g2"], params["be2"],
            params["w3"], params["b3"])
    return pl.pallas_call(
        _fc_discriminator_kernel,
        out_shape=jax.ShapeDtypeStruct((N, 1), jnp.float32),
        # Small problem: no grid — each operand is a single whole-array VMEM block.
        in_specs=[pl.BlockSpec(memory_space=pltpu.MemorySpace.VMEM)] * len(args),
        out_specs=pl.BlockSpec(memory_space=pltpu.MemorySpace.VMEM),
    )(*args)


def init_params(key, in_dim, h):
    """Deterministic synthetic init, PyTorch-style layout stored as (in, out).

    b1/b2 are omitted (cancelled exactly by the training-mode BN mean subtraction).
    Matmul weights are bf16 (half the HBM traffic, native MXU rate); BN affine
    params, w3 and b3 stay f32 so all VPU math is f32.
    """
    ks = jax.random.split(key, 4)
    s1 = 1.0 / jnp.sqrt(jnp.float32(in_dim))
    sh = 1.0 / jnp.sqrt(jnp.float32(h))
    return {
        # Linear 1 (bias dropped: cancelled by BN1)
        "w1": jax.random.uniform(ks[0], (in_dim, h), jnp.float32, -s1, s1
                                 ).astype(jnp.bfloat16),
        # BatchNorm1d 1 (PyTorch default init: weight=1, bias=0)
        "g1": jnp.ones((1, h), jnp.float32),
        "be1": jnp.zeros((1, h), jnp.float32),
        # Linear 2 (bias dropped: cancelled by BN2)
        "w2": jax.random.uniform(ks[1], (h, h), jnp.float32, -sh, sh
                                 ).astype(jnp.bfloat16),
        # BatchNorm1d 2
        "g2": jnp.ones((1, h), jnp.float32),
        "be2": jnp.zeros((1, h), jnp.float32),
        # Linear 3 (h -> 1), stored as a (1, h) row for the lane-wise reduction
        "w3": jax.random.uniform(ks[2], (1, h), jnp.float32, -sh, sh),
        "b3": jax.random.uniform(ks[3], (1, 1), jnp.float32, -sh, sh),
    }


if __name__ == "__main__":
    # Small shapes consistent with the module: imsize=(1, 8, 8)
    #   -> in_features = 1 * 8 * 2 * 8 = 128, hidden h = 256.
    imsize = (1, 8, 8)
    D = imsize[0] * imsize[1] * 2 * imsize[2]   # 128
    h = 256
    N = 8                                       # batch > 1 (BatchNorm1d training mode)

    key = jax.random.PRNGKey(0)
    k_x, k_p = jax.random.split(key)
    x = jax.random.normal(k_x, (N, D), jnp.float32)   # forward does x.view(N, -1)
    params = init_params(k_p, D, h)

    out = jax.jit(fc_discriminator)(x, params)
    out = jax.block_until_ready(out)

    assert out.shape == (N, 1)
    assert bool(jnp.all(jnp.isfinite(out)))
    assert bool(jnp.all((out >= 0.0) & (out <= 1.0)))  # sigmoid range
    print("KERNEL_OK")
</pallas_src>

<mosaic_0001>
module attributes {stable_mosaic.version = 11 : i64} {
  func.func @_fc_discriminator_kernel(%arg0: memref<8x128xbf16, #tpu.memory_space<vmem>>, %arg1: memref<128x256xbf16, #tpu.memory_space<vmem>>, %arg2: memref<1x256xf32, #tpu.memory_space<vmem>>, %arg3: memref<1x256xf32, #tpu.memory_space<vmem>>, %arg4: memref<256x256xbf16, #tpu.memory_space<vmem>>, %arg5: memref<1x256xf32, #tpu.memory_space<vmem>>, %arg6: memref<1x256xf32, #tpu.memory_space<vmem>>, %arg7: memref<1x256xf32, #tpu.memory_space<vmem>>, %arg8: memref<1x1xf32, #tpu.memory_space<vmem>>, %arg9: memref<8x1xf32, #tpu.memory_space<vmem>>) attributes {dimension_semantics = [], scalar_prefetch = 0 : i64, scratch_operands = 0 : i64, tpu.core_type = #tpu.core_type<tc>} {
    %c0 = arith.constant 0 : index
    %c0_0 = arith.constant 0 : index
    %0 = vector.load %arg0[%c0, %c0_0] : memref<8x128xbf16, #tpu.memory_space<vmem>>, vector<8x128xbf16>
    %c0_1 = arith.constant 0 : index
    %c0_2 = arith.constant 0 : index
    %1 = vector.load %arg1[%c0_1, %c0_2] : memref<128x256xbf16, #tpu.memory_space<vmem>>, vector<128x256xbf16>
    %cst = arith.constant dense<0.000000e+00> : vector<8x256xf32>
    %2 = tpu.matmul %0, %1, %cst {dimension_numbers = #tpu.dot_dimension_numbers<[1], [0], [0], [1], [0, 0, 1, 1], [], []>} : vector<8x128xbf16>, vector<128x256xbf16>, vector<8x256xf32> -> vector<8x256xf32>
    %cst_3 = arith.constant dense<0.000000e+00> : vector<256xf32>
    %3 = vector.multi_reduction <add>, %2, %cst_3 [0] : vector<8x256xf32> to vector<256xf32>
    %4 = vector.shape_cast %3 : vector<256xf32> to vector<1x256xf32>
    %cst_4 = arith.constant 1.250000e-01 : f32
    %5 = vector.broadcast %cst_4 : f32 to vector<1x256xf32>
    %6 = arith.mulf %4, %5 : vector<1x256xf32>
    %7 = arith.mulf %2, %2 : vector<8x256xf32>
    %cst_5 = arith.constant dense<0.000000e+00> : vector<256xf32>
    %8 = vector.multi_reduction <add>, %7, %cst_5 [0] : vector<8x256xf32> to vector<256xf32>
    %9 = vector.shape_cast %8 : vector<256xf32> to vector<1x256xf32>
    %cst_6 = arith.constant 1.250000e-01 : f32
    %10 = vector.broadcast %cst_6 : f32 to vector<1x256xf32>
    %11 = arith.mulf %9, %10 : vector<1x256xf32>
    %12 = arith.mulf %6, %6 : vector<1x256xf32>
    %13 = arith.subf %11, %12 : vector<1x256xf32>
    %c0_7 = arith.constant 0 : index
    %c0_8 = arith.constant 0 : index
    %14 = vector.load %arg2[%c0_7, %c0_8] : memref<1x256xf32, #tpu.memory_space<vmem>>, vector<1x256xf32>
    %cst_9 = arith.constant 9.99999974E-6 : f32
    %15 = vector.broadcast %cst_9 : f32 to vector<1x256xf32>
    %16 = arith.addf %13, %15 : vector<1x256xf32>
    %17 = math.rsqrt %16 : vector<1x256xf32>
    %18 = arith.mulf %14, %17 : vector<1x256xf32>
    %c0_10 = arith.constant 0 : index
    %c0_11 = arith.constant 0 : index
    %19 = vector.load %arg3[%c0_10, %c0_11] : memref<1x256xf32, #tpu.memory_space<vmem>>, vector<1x256xf32>
    %20 = arith.mulf %6, %18 : vector<1x256xf32>
    %21 = arith.subf %19, %20 : vector<1x256xf32>
    %22 = vector.broadcast %18 : vector<1x256xf32> to vector<8x256xf32>
    %23 = arith.mulf %2, %22 : vector<8x256xf32>
    %24 = vector.broadcast %21 : vector<1x256xf32> to vector<8x256xf32>
    %25 = arith.addf %23, %24 : vector<8x256xf32>
    %cst_12 = arith.constant 0.000000e+00 : f32
    %26 = vector.broadcast %cst_12 : f32 to vector<8x256xf32>
    %27 = arith.cmpf oge, %25, %26 : vector<8x256xf32>
    %cst_13 = arith.constant 2.000000e-01 : f32
    %28 = vector.broadcast %cst_13 : f32 to vector<8x256xf32>
    %29 = arith.mulf %28, %25 : vector<8x256xf32>
    %30 = arith.select %27, %25, %29 : vector<8x256xi1>, vector<8x256xf32>
    %31 = arith.truncf %30 : vector<8x256xf32> to vector<8x256xbf16>
    %c0_14 = arith.constant 0 : index
    %c0_15 = arith.constant 0 : index
    %32 = vector.load %arg4[%c0_14, %c0_15] : memref<256x256xbf16, #tpu.memory_space<vmem>>, vector<256x256xbf16>
    %cst_16 = arith.constant dense<0.000000e+00> : vector<8x256xf32>
    %33 = tpu.matmul %31, %32, %cst_16 {dimension_numbers = #tpu.dot_dimension_numbers<[1], [0], [0], [1], [0, 0, 1, 1], [], []>} : vector<8x256xbf16>, vector<256x256xbf16>, vector<8x256xf32> -> vector<8x256xf32>
    %cst_17 = arith.constant dense<0.000000e+00> : vector<256xf32>
    %34 = vector.multi_reduction <add>, %33, %cst_17 [0] : vector<8x256xf32> to vector<256xf32>
    %35 = vector.shape_cast %34 : vector<256xf32> to vector<1x256xf32>
    %cst_18 = arith.constant 1.250000e-01 : f32
    %36 = vector.broadcast %cst_18 : f32 to vector<1x256xf32>
    %37 = arith.mulf %35, %36 : vector<1x256xf32>
    %38 = arith.mulf %33, %33 : vector<8x256xf32>
    %cst_19 = arith.constant dense<0.000000e+00> : vector<256xf32>
    %39 = vector.multi_reduction <add>, %38, %cst_19 [0] : vector<8x256xf32> to vector<256xf32>
    %40 = vector.shape_cast %39 : vector<256xf32> to vector<1x256xf32>
    %cst_20 = arith.constant 1.250000e-01 : f32
    %41 = vector.broadcast %cst_20 : f32 to vector<1x256xf32>
    %42 = arith.mulf %40, %41 : vector<1x256xf32>
    %43 = arith.mulf %37, %37 : vector<1x256xf32>
    %44 = arith.subf %42, %43 : vector<1x256xf32>
    %c0_21 = arith.constant 0 : index
    %c0_22 = arith.constant 0 : index
    %45 = vector.load %arg5[%c0_21, %c0_22] : memref<1x256xf32, #tpu.memory_space<vmem>>, vector<1x256xf32>
    %cst_23 = arith.constant 9.99999974E-6 : f32
    %46 = vector.broadcast %cst_23 : f32 to vector<1x256xf32>
    %47 = arith.addf %44, %46 : vector<1x256xf32>
    %48 = math.rsqrt %47 : vector<1x256xf32>
    %49 = arith.mulf %45, %48 : vector<1x256xf32>
    %c0_24 = arith.constant 0 : index
    %c0_25 = arith.constant 0 : index
    %50 = vector.load %arg6[%c0_24, %c0_25] : memref<1x256xf32, #tpu.memory_space<vmem>>, vector<1x256xf32>
    %51 = arith.mulf %37, %49 : vector<1x256xf32>
    %52 = arith.subf %50, %51 : vector<1x256xf32>
    %53 = vector.broadcast %49 : vector<1x256xf32> to vector<8x256xf32>
    %54 = arith.mulf %33, %53 : vector<8x256xf32>
    %55 = vector.broadcast %52 : vector<1x256xf32> to vector<8x256xf32>
    %56 = arith.addf %54, %55 : vector<8x256xf32>
    %cst_26 = arith.constant 0.000000e+00 : f32
    %57 = vector.broadcast %cst_26 : f32 to vector<8x256xf32>
    %58 = arith.cmpf oge, %56, %57 : vector<8x256xf32>
    %cst_27 = arith.constant 2.000000e-01 : f32
    %59 = vector.broadcast %cst_27 : f32 to vector<8x256xf32>
    %60 = arith.mulf %59, %56 : vector<8x256xf32>
    %61 = arith.select %58, %56, %60 : vector<8x256xi1>, vector<8x256xf32>
    %c0_28 = arith.constant 0 : index
    %c0_29 = arith.constant 0 : index
    %62 = vector.load %arg7[%c0_28, %c0_29] : memref<1x256xf32, #tpu.memory_space<vmem>>, vector<1x256xf32>
    %63 = vector.broadcast %62 : vector<1x256xf32> to vector<8x256xf32>
    %64 = arith.mulf %61, %63 : vector<8x256xf32>
    %cst_30 = arith.constant dense<0.000000e+00> : vector<8xf32>
    %65 = vector.multi_reduction <add>, %64, %cst_30 [1] : vector<8x256xf32> to vector<8xf32>
    %66 = vector.shape_cast %65 : vector<8xf32> to vector<8x1xf32>
    %c0_31 = arith.constant 0 : index
    %c0_32 = arith.constant 0 : index
    %67 = vector.load %arg8[%c0_31, %c0_32] : memref<1x1xf32, #tpu.memory_space<vmem>>, vector<1x1xf32>
    %68 = vector.broadcast %67 : vector<1x1xf32> to vector<8x1xf32>
    %69 = arith.addf %66, %68 : vector<8x1xf32>
    %70 = arith.negf %69 : vector<8x1xf32>
    %71 = math.exp %70 : vector<8x1xf32>
    %cst_33 = arith.constant 1.000000e+00 : f32
    %72 = vector.broadcast %cst_33 : f32 to vector<8x1xf32>
    %73 = arith.addf %72, %71 : vector<8x1xf32>
    %74 = arith.divf %72, %73 : vector<8x1xf32>
    %c0_34 = arith.constant 0 : index
    %c0_35 = arith.constant 0 : index
    %75 = vector.load %arg9[%c0_34, %c0_35] : memref<8x1xf32, #tpu.memory_space<vmem>>, vector<8x1xf32>
    tpu.vector_store %arg9[%c0_34, %c0_35], %74 {strides = array<i32>} : memref<8x1xf32, #tpu.memory_space<vmem>>, vector<8x1xf32>,
    return
  }
}

</mosaic_0001>

<llo_original>
// kernel: fc_discriminator.1
$region0: #{fc_discriminator.1}
  #allocation0 [shape = 'u32[]', space=smem, size = 0x4, offset = 0x4, fixed_abs, tag = 'smem constant byte address 0x4 - core index']
  #allocation1 [shape = 'u32[144,128]{1,0:T(1,128)}', space=vmem, size = 0x12000, scoped, tag = 'internal scratch']
  #allocation2 [shape = 'f32[1,1]{1,0:T(1,128)S(1)}', space=vmem, size = 0x200, scoped, tag = 'scoped memory for fc_discriminator.1']
  %s0 = inlined_call_operand.vmem [shape: bf16[8,128], index: 0, kind: input, shape index: {}]
  %s1 = inlined_call_operand.hbm [shape: bf16[128,256], index: 1, kind: input, shape index: {}]
  %s2 = inlined_call_operand.vmem [shape: f32[1,256], index: 2, kind: input, shape index: {}]
  %s3 = inlined_call_operand.vmem [shape: f32[1,256], index: 3, kind: input, shape index: {}]
  %s4 = inlined_call_operand.hbm [shape: bf16[256,256], index: 4, kind: input, shape index: {}]
  %s5 = inlined_call_operand.vmem [shape: f32[1,256], index: 5, kind: input, shape index: {}]
  %s6 = inlined_call_operand.vmem [shape: f32[1,256], index: 6, kind: input, shape index: {}]
  %s7 = inlined_call_operand.vmem [shape: f32[1,256], index: 7, kind: input, shape index: {}]
  %s8 = inlined_call_operand.<no memory space> [shape: f32[1,1], index: 8, kind: input, shape index: {}]
  %s9 = inlined_call_operand.vmem [shape: f32[8,1], index: 9, kind: output, shape index: {}]
  %s10 = sld [smem:[#allocation0]]
  $region54: #{fc_discriminator.1} parent=0
    _
  %s12 = ssub.s32 1, %s10
  %s13 = scalar_select 0, %s12, %s10
  %v14 = vstv %s8
  %15 = vst [vmem:[#allocation2] sm:$0x1] %v14
  $region1: #{fc_discriminator.1} parent=0
    #allocation3 [shape = 'u8[65536]{0}', space=vmem, size = 0x10000, scoped, tag = 'input window, operand 1, single buffered']
    #allocation4 [shape = 's32[1]{0}', space=sflag, size = 0x4, scoped, tag = 'scoped memory for fc_discriminator.1']
    #allocation5 [shape = 'u8[131072]{0}', space=vmem, size = 0x20000, scoped, tag = 'input window, operand 4, single buffered']
    #allocation6 [shape = 's32[1]{0}', space=sflag, size = 0x4, scoped, tag = 'scoped memory for fc_discriminator.1']
    %16 = vsyncpa [#allocation4], 0
    %17 = vsyncpa [#allocation6], 0
    // Predicated region
    $region2: #{fc_discriminator.1} parent=1 // pred_check
      _
    $region3: #{fc_discriminator.1} parent=1 // pred_check_branch
      %19 = sbr.rel (0) target = $region5
    $region4: #{fc_discriminator.1} parent=1 // pred_region
      _
    $region5: #{fc_discriminator.1} parent=1 // pred_fallthru
      _
    // Predicated region
    $region6: #{fc_discriminator.1} parent=1 // pred_check
      _
    $region7: #{fc_discriminator.1} parent=1 // pred_check_branch
      %21 = sbr.rel (0) target = $region9
    $region8: #{fc_discriminator.1} parent=1 // pred_region
      %s23 = ssub.s32 2048, 2048
      %24 = vsyncadd [#allocation4], %s23
      %s25 = sshll.u32 [#allocation3], 4
      %s26 = int_to_ptr.vmem [resolvable:$true] %s25
      %31 = dma.hbm_to_vmem [thread:$0]  %s1, 2048, %s26, [#allocation4], 128, 128, 8
    $region9: #{fc_discriminator.1} parent=1 // pred_fallthru
      _
    // Predicated region
    $region10: #{fc_discriminator.1} parent=1 // pred_check
      _
    $region11: #{fc_discriminator.1} parent=1 // pred_check_branch
      %33 = sbr.rel (0) target = $region13
    $region12: #{fc_discriminator.1} parent=1 // pred_region
      _
    $region13: #{fc_discriminator.1} parent=1 // pred_fallthru
      _
    // Predicated region
    $region14: #{fc_discriminator.1} parent=1 // pred_check
      _
    $region15: #{fc_discriminator.1} parent=1 // pred_check_branch
      %35 = sbr.rel (0) target = $region17
    $region16: #{fc_discriminator.1} parent=1 // pred_region
      _
    $region17: #{fc_discriminator.1} parent=1 // pred_fallthru
      _
    // Predicated region
    $region18: #{fc_discriminator.1} parent=1 // pred_check
      _
    $region19: #{fc_discriminator.1} parent=1 // pred_check_branch
      %37 = sbr.rel (0) target = $region21
    $region20: #{fc_discriminator.1} parent=1 // pred_region
      %s39 = ssub.s32 4096, 4096
      %40 = vsyncadd [#allocation6], %s39
      %s41 = sshll.u32 [#allocation5], 4
      %s42 = int_to_ptr.vmem [resolvable:$true] %s41
      %47 = dma.hbm_to_vmem [thread:$0]  %s4, 4096, %s42, [#allocation6], 128, 128, 8
    $region21: #{fc_discriminator.1} parent=1 // pred_fallthru
      _
    // Predicated region
    $region22: #{fc_discriminator.1} parent=1 // pred_check
      _
    $region23: #{fc_discriminator.1} parent=1 // pred_check_branch
      %49 = sbr.rel (0) target = $region25
    $region24: #{fc_discriminator.1} parent=1 // pred_region
      _
    $region25: #{fc_discriminator.1} parent=1 // pred_fallthru
      _
    // Predicated region
    $region26: #{fc_discriminator.1} parent=1 // pred_check
      _
    $region27: #{fc_discriminator.1} parent=1 // pred_check_branch
      %51 = sbr.rel (0) target = $region29
    $region28: #{fc_discriminator.1} parent=1 // pred_region
      _
    $region29: #{fc_discriminator.1} parent=1 // pred_fallthru
      _
    // Predicated region
    $region30: #{fc_discriminator.1} parent=1 // pred_check
      _
    $region31: #{fc_discriminator.1} parent=1 // pred_check_branch
      %53 = sbr.rel (0) target = $region33
    $region32: #{fc_discriminator.1} parent=1 // pred_region
      _
    $region33: #{fc_discriminator.1} parent=1 // pred_fallthru
      _
    // Predicated region
    $region34: #{fc_discriminator.1} parent=1 // pred_check
      _
    $region35: #{fc_discriminator.1} parent=1 // pred_check_branch
      %55 = sbr.rel (0) target = $region37
    $region36: #{fc_discriminator.1} parent=1 // pred_region
      _
    $region37: #{fc_discriminator.1} parent=1 // pred_fallthru
      _
    // Predicated region
    $region38: #{fc_discriminator.1} parent=1 // pred_check
      _
    $region39: #{fc_discriminator.1} parent=1 // pred_check_branch
      %57 = sbr.rel (0) target = $region41
    $region40: #{fc_discriminator.1} parent=1 // pred_region
      %58 = dma.done [#allocation4], 2048
    $region41: #{fc_discriminator.1} parent=1 // pred_fallthru
      _
    // Predicated region
    $region42: #{fc_discriminator.1} parent=1 // pred_check
      _
    $region43: #{fc_discriminator.1} parent=1 // pred_check_branch
      %60 = sbr.rel (0) target = $region45
    $region44: #{fc_discriminator.1} parent=1 // pred_region
      %61 = dma.done [#allocation6], 4096
    $region45: #{fc_discriminator.1} parent=1 // pred_fallthru
      _
    %v63 = vld [vmem:[%s0] sm:$0xf]
    %v64 = vld [vmem:[#allocation3] sm:$0xff]
    %v65 = vld [vmem:[#allocation3 + $0x8] sm:$0xff]
    %v66 = vld [vmem:[#allocation3 + $0x10] sm:$0xff]
    %v67 = vld [vmem:[#allocation3 + $0x18] sm:$0xff]
    %v68 = vld [vmem:[#allocation3 + $0x20] sm:$0xff]
    %v69 = vld [vmem:[#allocation3 + $0x28] sm:$0xff]
    %v70 = vld [vmem:[#allocation3 + $0x30] sm:$0xff]
    %v71 = vld [vmem:[#allocation3 + $0x38] sm:$0xff]
    %v72 = vld [vmem:[#allocation3 + $0x40] sm:$0xff]
    %v73 = vld [vmem:[#allocation3 + $0x48] sm:$0xff]
    %v74 = vld [vmem:[#allocation3 + $0x50] sm:$0xff]
    %v75 = vld [vmem:[#allocation3 + $0x58] sm:$0xff]
    %v76 = vld [vmem:[#allocation3 + $0x60] sm:$0xff]
    %v77 = vld [vmem:[#allocation3 + $0x68] sm:$0xff]
    %v78 = vld [vmem:[#allocation3 + $0x70] sm:$0xff]
    %v79 = vld [vmem:[#allocation3 + $0x78] sm:$0xff]
    %v96 = vunpack.c.l.b16 %v64
    %v97 = vunpack.c.h.b16 %v64
    %v98 = vunpack.c.l.b16 %v65
    %v99 = vunpack.c.h.b16 %v65
    %v100 = vunpack.c.l.b16 %v66
    %v101 = vunpack.c.h.b16 %v66
    %v102 = vunpack.c.l.b16 %v67
    %v103 = vunpack.c.h.b16 %v67
    %v104 = vunpack.c.l.b16 %v68
    %v105 = vunpack.c.h.b16 %v68
    %v106 = vunpack.c.l.b16 %v69
    %v107 = vunpack.c.h.b16 %v69
    %v108 = vunpack.c.l.b16 %v70
    %v109 = vunpack.c.h.b16 %v70
    %v110 = vunpack.c.l.b16 %v71
    %v111 = vunpack.c.h.b16 %v71
    %v112 = vunpack.c.l.b16 %v72
    %v113 = vunpack.c.h.b16 %v72
    %v114 = vunpack.c.l.b16 %v73
    %v115 = vunpack.c.h.b16 %v73
    %v116 = vunpack.c.l.b16 %v74
    %v117 = vunpack.c.h.b16 %v74
    %v118 = vunpack.c.l.b16 %v75
    %v119 = vunpack.c.h.b16 %v75
    %v120 = vunpack.c.l.b16 %v76
    %v121 = vunpack.c.h.b16 %v76
    %v122 = vunpack.c.l.b16 %v77
    %v123 = vunpack.c.h.b16 %v77
    %v124 = vunpack.c.l.b16 %v78
    %v125 = vunpack.c.h.b16 %v78
    %v126 = vunpack.c.l.b16 %v79
    %v127 = vunpack.c.h.b16 %v79
    %v128 = vpack.c.b16 %v98, %v96
    %v129 = vpack.c.b16 %v99, %v97
    %v130 = vpack.c.b16 %v102, %v100
    %v131 = vpack.c.b16 %v103, %v101
    %v132 = vpack.c.b16 %v106, %v104
    %v133 = vpack.c.b16 %v107, %v105
    %v134 = vpack.c.b16 %v110, %v108
    %v135 = vpack.c.b16 %v111, %v109
    %v136 = vpack.c.b16 %v114, %v112
    %v137 = vpack.c.b16 %v115, %v113
    %v138 = vpack.c.b16 %v118, %v116
    %v139 = vpack.c.b16 %v119, %v117
    %v140 = vpack.c.b16 %v122, %v120
    %v141 = vpack.c.b16 %v123, %v121
    %v142 = vpack.c.b16 %v126, %v124
    %v143 = vpack.c.b16 %v127, %v125
    %160 = vmatprep.subr.bf16.mxu0 %v129
    %161 = vmatpush1.bf16.msra.mxu0 %v128
    %162 = vmatprep.subr.bf16.mxu0 %v131
    %163 = vmatpush1.bf16.msra.mxu0 %v130
    %164 = vmatprep.subr.bf16.mxu0 %v133
    %165 = vmatpush1.bf16.msra.mxu0 %v132
    %166 = vmatprep.subr.bf16.mxu0 %v135
    %167 = vmatpush1.bf16.msra.mxu0 %v134
    %168 = vmatprep.subr.bf16.mxu0 %v137
    %169 = vmatpush1.bf16.msra.mxu0 %v136
    %170 = vmatprep.subr.bf16.mxu0 %v139
    %171 = vmatpush1.bf16.msra.mxu0 %v138
    %172 = vmatprep.subr.bf16.mxu0 %v141
    %173 = vmatpush1.bf16.msra.mxu0 %v140
    %174 = vmatprep.subr.bf16.mxu0 %v143
    %175 = vmatpush1.bf16.msra.mxu0 %v142
    %176 = vmatprep.subr.bf16.mxu0 0
    %177 = vmatpush1.bf16.msra.mxu0 0
    %178 = vmatprep.subr.bf16.mxu0 0
    %179 = vmatpush1.bf16.msra.mxu0 0
    %180 = vmatprep.subr.bf16.mxu0 0
    %181 = vmatpush1.bf16.msra.mxu0 0
    %182 = vmatprep.subr.bf16.mxu0 0
    %183 = vmatpush1.bf16.msra.mxu0 0
    %184 = vmatprep.subr.bf16.mxu0 0
    %185 = vmatpush1.bf16.msra.mxu0 0
    %186 = vmatprep.subr.bf16.mxu0 0
    %187 = vmatpush1.bf16.msra.mxu0 0
    %188 = vmatprep.subr.bf16.mxu0 0
    %189 = vmatpush1.bf16.msra.mxu0 0
    %190 = vmatprep.subr.bf16.mxu0 0
    %191 = vmatpush1.bf16.msra.mxu0 0
    %192 = vmatprep.mubr.bf16.mxu0 0
    %193 = vmatmul.mubr.bf16.gmra.mrb[0].mxu0 %v63
    %v194 = vpop.f32.mrb[0].mxu0
    %v195 = vadd.f32 0.0, %v194
    %v196 = vpop.f32.mrb[0].mxu0
    %v197 = vadd.f32 0.0, %v196
    %v198 = vpop.f32.mrb[0].mxu0
    %v199 = vpop.f32.mrb[0].mxu0
    %200 = vdwg.mxu0
    %v201 = vrot.slane %v195, 4
    %v202 = vadd.f32 %v195, %v201
    %v203 = vrot.slane %v202, 2
    %v204 = vadd.f32 %v202, %v203
    %v205 = vrot.slane %v204, 1
    %v206 = vadd.f32 %v204, %v205
    %v207 = vrot.slane %v197, 4
    %v208 = vadd.f32 %v197, %v207
    %v209 = vrot.slane %v208, 2
    %v210 = vadd.f32 %v208, %v209
    %v211 = vrot.slane %v210, 1
    %v212 = vadd.f32 %v210, %v211
    %v213 = vmul.f32 %v206, 0.125
    %v214 = vmul.f32 %v212, 0.125
    %v215 = vmul.f32 %v195, %v195
    %v216 = vmul.f32 %v197, %v197
    %v217 = vrot.slane %v215, 4
    %v218 = vadd.f32 %v215, %v217
    %v219 = vrot.slane %v218, 2
    %v220 = vadd.f32 %v218, %v219
    %v221 = vrot.slane %v220, 1
    %v222 = vadd.f32 %v220, %v221
    %v223 = vrot.slane %v216, 4
    %v224 = vadd.f32 %v216, %v223
    %v225 = vrot.slane %v224, 2
    %v226 = vadd.f32 %v224, %v225
    %v227 = vrot.slane %v226, 1
    %v228 = vadd.f32 %v226, %v227
    %v229 = vmul.f32 %v222, 0.125
    %v230 = vmul.f32 %v228, 0.125
    %v231 = vmul.f32 %v213, %v213
    %v232 = vmul.f32 %v214, %v214
    %v233 = vsub.f32 %v229, %v231
    %v234 = vsub.f32 %v230, %v232
    %v235 = vld [vmem:[%s2] sm:$0x3]
    %v236 = vadd.f32 %v233, 1e-05
    %v237 = vadd.f32 %v234, 1e-05
    %v238 = vrsqrt.pop %v236
    %v239 = vrsqrt.pop %v237
    %v242 = vcombine.low %v238, %v239
    %v244 = vunpack.c.l.s4 1966171168
    %v245 = vunpack.c.0.s8 %v244
    %v246 = vlaneseq
    %v247 = vshrl.u32 %v246, 7
    %v248 = vsub.s32 %v245, %v247
    %v249 = vrot.slane %v242, %v248
    %v251 = vunpack.c.l.s4 1966171168
    %v252 = vunpack.c.0.s8 %v251
    %v253 = vlaneseq
    %v254 = vshrl.u32 %v253, 7
    %v255 = vsub.s32 %v252, %v254
    %v256 = vrot.slane %v249, %v255
    %v258 = vmul.f32 %v235, %v256
    %v259 = vld [vmem:[%s3] sm:$0x3]
    %v261 = vlaneseq
    %v262 = vshrl.u32 %v261, 7
    %v263 = vsub.s32 0, %v262
    %v264 = vrot.slane %v258, %v263
    %v265 = vlaneseq
    %v266 = vshrl.u32 %v265, 7
    %v267 = vsub.s32 1, %v266
    %v268 = vrot.slane %v258, %v267
    %v271 = vmul.f32 %v213, %v264
    %v272 = vmul.f32 %v214, %v268
    %v275 = vcombine.low %v271, %v272
    %v277 = vunpack.c.l.s4 1966171168
    %v278 = vunpack.c.0.s8 %v277
    %v279 = vlaneseq
    %v280 = vshrl.u32 %v279, 7
    %v281 = vsub.s32 %v278, %v280
    %v282 = vrot.slane %v275, %v281
    %v284 = vunpack.c.l.s4 1966171168
    %v285 = vunpack.c.0.s8 %v284
    %v286 = vlaneseq
    %v287 = vshrl.u32 %v286, 7
    %v288 = vsub.s32 %v285, %v287
    %v289 = vrot.slane %v282, %v288
    %v291 = vsub.f32 %v259, %v289
    %v292 = vmul.f32 %v195, %v264
    %v293 = vmul.f32 %v197, %v268
    %v295 = vlaneseq
    %v296 = vshrl.u32 %v295, 7
    %v297 = vsub.s32 0, %v296
    %v298 = vrot.slane %v291, %v297
    %v299 = vlaneseq
    %v300 = vshrl.u32 %v299, 7
    %v301 = vsub.s32 1, %v300
    %v302 = vrot.slane %v291, %v301
    %v305 = vadd.f32 %v292, %v298
    %v306 = vadd.f32 %v293, %v302
    %vm307 = vcmp.ge.f32.partialorder %v305, 0.0
    %vm308 = vcmp.ge.f32.partialorder %v306, 0.0
    %v309 = vmul.f32 %v305, 0.2
    %v310 = vmul.f32 %v306, 0.2
    %v311 = vsel %vm307, %v305, %v309
    %v312 = vsel %vm308, %v306, %v310
    %v313 = vpack.c.bf16 %v311, %v311
    %v314 = vpack.c.bf16 %v312, %v312
    %v315 = vld [vmem:[#allocation5] sm:$0xff]
    %v316 = vld [vmem:[#allocation5 + $0x8] sm:$0xff]
    %v317 = vld [vmem:[#allocation5 + $0x10] sm:$0xff]
    %v318 = vld [vmem:[#allocation5 + $0x18] sm:$0xff]
    %v319 = vld [vmem:[#allocation5 + $0x20] sm:$0xff]
    %v320 = vld [vmem:[#allocation5 + $0x28] sm:$0xff]
    %v321 = vld [vmem:[#allocation5 + $0x30] sm:$0xff]
    %v322 = vld [vmem:[#allocation5 + $0x38] sm:$0xff]
    %v323 = vld [vmem:[#allocation5 + $0x40] sm:$0xff]
    %v324 = vld [vmem:[#allocation5 + $0x48] sm:$0xff]
    %v325 = vld [vmem:[#allocation5 + $0x50] sm:$0xff]
    %v326 = vld [vmem:[#allocation5 + $0x58] sm:$0xff]
    %v327 = vld [vmem:[#allocation5 + $0x60] sm:$0xff]
    %v328 = vld [vmem:[#allocation5 + $0x68] sm:$0xff]
    %v329 = vld [vmem:[#allocation5 + $0x70] sm:$0xff]
    %v330 = vld [vmem:[#allocation5 + $0x78] sm:$0xff]
    %v331 = vld [vmem:[#allocation5 + $0x80] sm:$0xff]
    %v332 = vld [vmem:[#allocation5 + $0x88] sm:$0xff]
    %v333 = vld [vmem:[#allocation5 + $0x90] sm:$0xff]
    %v334 = vld [vmem:[#allocation5 + $0x98] sm:$0xff]
    %v335 = vld [vmem:[#allocation5 + $0xa0] sm:$0xff]
    %v336 = vld [vmem:[#allocation5 + $0xa8] sm:$0xff]
    %v337 = vld [vmem:[#allocation5 + $0xb0] sm:$0xff]
    %v338 = vld [vmem:[#allocation5 + $0xb8] sm:$0xff]
    %v339 = vld [vmem:[#allocation5 + $0xc0] sm:$0xff]
    %v340 = vld [vmem:[#allocation5 + $0xc8] sm:$0xff]
    %v341 = vld [vmem:[#allocation5 + $0xd0] sm:$0xff]
    %v342 = vld [vmem:[#allocation5 + $0xd8] sm:$0xff]
    %v343 = vld [vmem:[#allocation5 + $0xe0] sm:$0xff]
    %v344 = vld [vmem:[#allocation5 + $0xe8] sm:$0xff]
    %v345 = vld [vmem:[#allocation5 + $0xf0] sm:$0xff]
    %v346 = vld [vmem:[#allocation5 + $0xf8] sm:$0xff]
    %v379 = vunpack.c.l.b16 %v315
    %v380 = vunpack.c.h.b16 %v315
    %v381 = vunpack.c.l.b16 %v316
    %v382 = vunpack.c.h.b16 %v316
    %v383 = vunpack.c.l.b16 %v317
    %v384 = vunpack.c.h.b16 %v317
    %v385 = vunpack.c.l.b16 %v318
    %v386 = vunpack.c.h.b16 %v318
    %v387 = vunpack.c.l.b16 %v319
    %v388 = vunpack.c.h.b16 %v319
    %v389 = vunpack.c.l.b16 %v320
    %v390 = vunpack.c.h.b16 %v320
    %v391 = vunpack.c.l.b16 %v321
    %v392 = vunpack.c.h.b16 %v321
    %v393 = vunpack.c.l.b16 %v322
    %v394 = vunpack.c.h.b16 %v322
    %v395 = vunpack.c.l.b16 %v323
    %v396 = vunpack.c.h.b16 %v323
    %v397 = vunpack.c.l.b16 %v324
    %v398 = vunpack.c.h.b16 %v324
    %v399 = vunpack.c.l.b16 %v325
    %v400 = vunpack.c.h.b16 %v325
    %v401 = vunpack.c.l.b16 %v326
    %v402 = vunpack.c.h.b16 %v326
    %v403 = vunpack.c.l.b16 %v327
    %v404 = vunpack.c.h.b16 %v327
    %v405 = vunpack.c.l.b16 %v328
    %v406 = vunpack.c.h.b16 %v328
    %v407 = vunpack.c.l.b16 %v329
    %v408 = vunpack.c.h.b16 %v329
    %v409 = vunpack.c.l.b16 %v330
    %v410 = vunpack.c.h.b16 %v330
    %v411 = vunpack.c.l.b16 %v331
    %v412 = vunpack.c.h.b16 %v331
    %v413 = vunpack.c.l.b16 %v332
    %v414 = vunpack.c.h.b16 %v332
    %v415 = vunpack.c.l.b16 %v333
    %v416 = vunpack.c.h.b16 %v333
    %v417 = vunpack.c.l.b16 %v334
    %v418 = vunpack.c.h.b16 %v334
    %v419 = vunpack.c.l.b16 %v335
    %v420 = vunpack.c.h.b16 %v335
    %v421 = vunpack.c.l.b16 %v336
    %v422 = vunpack.c.h.b16 %v336
    %v423 = vunpack.c.l.b16 %v337
    %v424 = vunpack.c.h.b16 %v337
    %v425 = vunpack.c.l.b16 %v338
    %v426 = vunpack.c.h.b16 %v338
    %v427 = vunpack.c.l.b16 %v339
    %v428 = vunpack.c.h.b16 %v339
    %v429 = vunpack.c.l.b16 %v340
    %v430 = vunpack.c.h.b16 %v340
    %v431 = vunpack.c.l.b16 %v341
    %v432 = vunpack.c.h.b16 %v341
    %v433 = vunpack.c.l.b16 %v342
    %v434 = vunpack.c.h.b16 %v342
    %v435 = vunpack.c.l.b16 %v343
    %v436 = vunpack.c.h.b16 %v343
    %v437 = vunpack.c.l.b16 %v344
    %v438 = vunpack.c.h.b16 %v344
    %v439 = vunpack.c.l.b16 %v345
    %v440 = vunpack.c.h.b16 %v345
    %v441 = vunpack.c.l.b16 %v346
    %v442 = vunpack.c.h.b16 %v346
    %v443 = vpack.c.b16 %v381, %v379
    %v444 = vpack.c.b16 %v382, %v380
    %v445 = vpack.c.b16 %v385, %v383
    %v446 = vpack.c.b16 %v386, %v384
    %v447 = vpack.c.b16 %v389, %v387
    %v448 = vpack.c.b16 %v390, %v388
    %v449 = vpack.c.b16 %v393, %v391
    %v450 = vpack.c.b16 %v394, %v392
    %v451 = vpack.c.b16 %v397, %v395
    %v452 = vpack.c.b16 %v398, %v396
    %v453 = vpack.c.b16 %v401, %v399
    %v454 = vpack.c.b16 %v402, %v400
    %v455 = vpack.c.b16 %v405, %v403
    %v456 = vpack.c.b16 %v406, %v404
    %v457 = vpack.c.b16 %v409, %v407
    %v458 = vpack.c.b16 %v410, %v408
    %v459 = vpack.c.b16 %v413, %v411
    %v460 = vpack.c.b16 %v414, %v412
    %v461 = vpack.c.b16 %v417, %v415
    %v462 = vpack.c.b16 %v418, %v416
    %v463 = vpack.c.b16 %v421, %v419
    %v464 = vpack.c.b16 %v422, %v420
    %v465 = vpack.c.b16 %v425, %v423
    %v466 = vpack.c.b16 %v426, %v424
    %v467 = vpack.c.b16 %v429, %v427
    %v468 = vpack.c.b16 %v430, %v428
    %v469 = vpack.c.b16 %v433, %v431
    %v470 = vpack.c.b16 %v434, %v432
    %v471 = vpack.c.b16 %v437, %v435
    %v472 = vpack.c.b16 %v438, %v436
    %v473 = vpack.c.b16 %v441, %v439
    %v474 = vpack.c.b16 %v442, %v440
    %507 = vmatprep.subr.bf16.mxu0 %v444
    %508 = vmatpush1.bf16.msra.mxu0 %v443
    %509 = vmatprep.subr.bf16.mxu0 %v446
    %510 = vmatpush1.bf16.msra.mxu0 %v445
    %511 = vmatprep.subr.bf16.mxu0 %v448
    %512 = vmatpush1.bf16.msra.mxu0 %v447
    %513 = vmatprep.subr.bf16.mxu0 %v450
    %514 = vmatpush1.bf16.msra.mxu0 %v449
    %515 = vmatprep.subr.bf16.mxu0 %v452
    %516 = vmatpush1.bf16.msra.mxu0 %v451
    %517 = vmatprep.subr.bf16.mxu0 %v454
    %518 = vmatpush1.bf16.msra.mxu0 %v453
    %519 = vmatprep.subr.bf16.mxu0 %v456
    %520 = vmatpush1.bf16.msra.mxu0 %v455
    %521 = vmatprep.subr.bf16.mxu0 %v458
    %522 = vmatpush1.bf16.msra.mxu0 %v457
    %523 = vmatprep.subr.bf16.mxu0 %v460
    %524 = vmatpush1.bf16.msra.mxu0 %v459
    %525 = vmatprep.subr.bf16.mxu0 %v462
    %526 = vmatpush1.bf16.msra.mxu0 %v461
    %527 = vmatprep.subr.bf16.mxu0 %v464
    %528 = vmatpush1.bf16.msra.mxu0 %v463
    %529 = vmatprep.subr.bf16.mxu0 %v466
    %530 = vmatpush1.bf16.msra.mxu0 %v465
    %531 = vmatprep.subr.bf16.mxu0 %v468
    %532 = vmatpush1.bf16.msra.mxu0 %v467
    %533 = vmatprep.subr.bf16.mxu0 %v470
    %534 = vmatpush1.bf16.msra.mxu0 %v469
    %535 = vmatprep.subr.bf16.mxu0 %v472
    %536 = vmatpush1.bf16.msra.mxu0 %v471
    %537 = vmatprep.subr.bf16.mxu0 %v474
    %538 = vmatpush1.bf16.msra.mxu0 %v473
    %539 = vmatprep.mubr.bf16.mxu0 %v314
    %540 = vmatmul.mubr.bf16.gmra.mrb[0].mxu0 %v313
    %v541 = vpop.f32.mrb[0].mxu0
    %v542 = vadd.f32 0.0, %v541
    %v543 = vpop.f32.mrb[0].mxu0
    %v544 = vadd.f32 0.0, %v543
    %v545 = vpop.f32.mrb[0].mxu0
    %v546 = vpop.f32.mrb[0].mxu0
    %547 = vdwg.mxu0
    %v548 = vrot.slane %v542, 4
    %v549 = vadd.f32 %v542, %v548
    %v550 = vrot.slane %v549, 2
    %v551 = vadd.f32 %v549, %v550
    %v552 = vrot.slane %v551, 1
    %v553 = vadd.f32 %v551, %v552
    %v554 = vrot.slane %v544, 4
    %v555 = vadd.f32 %v544, %v554
    %v556 = vrot.slane %v555, 2
    %v557 = vadd.f32 %v555, %v556
    %v558 = vrot.slane %v557, 1
    %v559 = vadd.f32 %v557, %v558
    %v560 = vmul.f32 %v553, 0.125
    %v561 = vmul.f32 %v559, 0.125
    %v562 = vmul.f32 %v542, %v542
    %v563 = vmul.f32 %v544, %v544
    %v564 = vrot.slane %v562, 4
    %v565 = vadd.f32 %v562, %v564
    %v566 = vrot.slane %v565, 2
    %v567 = vadd.f32 %v565, %v566
    %v568 = vrot.slane %v567, 1
    %v569 = vadd.f32 %v567, %v568
    %v570 = vrot.slane %v563, 4
    %v571 = vadd.f32 %v563, %v570
    %v572 = vrot.slane %v571, 2
    %v573 = vadd.f32 %v571, %v572
    %v574 = vrot.slane %v573, 1
    %v575 = vadd.f32 %v573, %v574
    %v576 = vmul.f32 %v569, 0.125
    %v577 = vmul.f32 %v575, 0.125
    %v578 = vmul.f32 %v560, %v560
    %v579 = vmul.f32 %v561, %v561
    %v580 = vsub.f32 %v576, %v578
    %v581 = vsub.f32 %v577, %v579
    %v582 = vld [vmem:[%s5] sm:$0x3]
    %v583 = vadd.f32 %v580, 1e-05
    %v584 = vadd.f32 %v581, 1e-05
    %v585 = vrsqrt.pop %v583
    %v586 = vrsqrt.pop %v584
    %v589 = vcombine.low %v585, %v586
    %v591 = vunpack.c.l.s4 1966171168
    %v592 = vunpack.c.0.s8 %v591
    %v593 = vlaneseq
    %v594 = vshrl.u32 %v593, 7
    %v595 = vsub.s32 %v592, %v594
    %v596 = vrot.slane %v589, %v595
    %v598 = vunpack.c.l.s4 1966171168
    %v599 = vunpack.c.0.s8 %v598
    %v600 = vlaneseq
    %v601 = vshrl.u32 %v600, 7
    %v602 = vsub.s32 %v599, %v601
    %v603 = vrot.slane %v596, %v602
    %v605 = vmul.f32 %v582, %v603
    %v606 = vld [vmem:[%s6] sm:$0x3]
    %v608 = vlaneseq
    %v609 = vshrl.u32 %v608, 7
    %v610 = vsub.s32 0, %v609
    %v611 = vrot.slane %v605, %v610
    %v612 = vlaneseq
    %v613 = vshrl.u32 %v612, 7
    %v614 = vsub.s32 1, %v613
    %v615 = vrot.slane %v605, %v614
    %v618 = vmul.f32 %v560, %v611
    %v619 = vmul.f32 %v561, %v615
    %v622 = vcombine.low %v618, %v619
    %v624 = vunpack.c.l.s4 1966171168
    %v625 = vunpack.c.0.s8 %v624
    %v626 = vlaneseq
    %v627 = vshrl.u32 %v626, 7
    %v628 = vsub.s32 %v625, %v627
    %v629 = vrot.slane %v622, %v628
    %v631 = vunpack.c.l.s4 1966171168
    %v632 = vunpack.c.0.s8 %v631
    %v633 = vlaneseq
    %v634 = vshrl.u32 %v633, 7
    %v635 = vsub.s32 %v632, %v634
    %v636 = vrot.slane %v629, %v635
    %v638 = vsub.f32 %v606, %v636
    %v639 = vmul.f32 %v542, %v611
    %v640 = vmul.f32 %v544, %v615
    %v642 = vlaneseq
    %v643 = vshrl.u32 %v642, 7
    %v644 = vsub.s32 0, %v643
    %v645 = vrot.slane %v638, %v644
    %v646 = vlaneseq
    %v647 = vshrl.u32 %v646, 7
    %v648 = vsub.s32 1, %v647
    %v649 = vrot.slane %v638, %v648
    %v652 = vadd.f32 %v639, %v645
    %v653 = vadd.f32 %v640, %v649
    %vm654 = vcmp.ge.f32.partialorder %v652, 0.0
    %vm655 = vcmp.ge.f32.partialorder %v653, 0.0
    %v656 = vmul.f32 %v652, 0.2
    %v657 = vmul.f32 %v653, 0.2
    %v658 = vsel %vm654, %v652, %v656
    %v659 = vsel %vm655, %v653, %v657
    %v660 = vld [vmem:[%s7] sm:$0x3]
    %v662 = vlaneseq
    %v663 = vshrl.u32 %v662, 7
    %v664 = vsub.s32 0, %v663
    %v665 = vrot.slane %v660, %v664
    %v666 = vlaneseq
    %v667 = vshrl.u32 %v666, 7
    %v668 = vsub.s32 1, %v667
    %v669 = vrot.slane %v660, %v668
    %v672 = vmul.f32 %v658, %v665
    %v673 = vmul.f32 %v659, %v669
    %v674 = vadd.f32 %v672, %v673
    %675 = vadd.xlane.f32.xlu0 %v674
    %v676 = vpop.xlane.xlu0 %675
    %v677 = vld [vmem:[#allocation2] sm:$0x1]
    %v679 = vlaneseq
    %v680 = vshrl.u32 %v679, 7
    %v681 = vsub.s32 0, %v680
    %v682 = vrot.slane %v677, %v681
    %v684 = vadd.f32 %v676, %v682
    %v685 = vxor.u32 %v684, 2147483648
    %v686 = vmul.f32 %v685, 1.442695
    %v687 = vpow.pop %v686
    %v688 = vadd.f32 %v687, 1.0
    %v689 = vrcp.pop %v688
    %v690 = vmul.f32 1.0, %v689
    %vm691 = vcmask 7168
    %692 = vst.msk [vmem:[%s9] sm:$0xff] %vm691, %v690
    // Predicated region
    $region46: #{fc_discriminator.1} parent=1 // pred_check
      _
    $region47: #{fc_discriminator.1} parent=1 // pred_check_branch
      %694 = sbr.rel (0) target = $region49
    $region48: #{fc_discriminator.1} parent=1 // pred_region
      _
    $region49: #{fc_discriminator.1} parent=1 // pred_fallthru
      _
    // Predicated region
    $region50: #{fc_discriminator.1} parent=1 // pred_check
      _
    $region51: #{fc_discriminator.1} parent=1 // pred_check_branch
      %696 = sbr.rel (0) target = $region53
    $region52: #{fc_discriminator.1} parent=1 // pred_region
      _
    $region53: #{fc_discriminator.1} parent=1 // pred_fallthru
      _
    %697 = vsyncpa [#allocation4], 1
    %698 = vsyncpa [#allocation6], 1

</llo_original>
